<compile_context>
chip_gen: v7x
topology: tpu7x:2x2x1
jax: 0.10.0
libtpu: 0.0.40
codegen_flags: <defaults>
</compile_context>

<pallas_src>
import jax
import jax.numpy as jnp
from jax.experimental import pallas as pl
from jax.experimental.pallas import tpu as pltpu

HIDDEN = 128      # first Linear's output width (matches nn.Linear(img_dim, 128))
SUBLANES = 8      # sublane pad for the transposed w2 operand


def discriminator_kernel(x_ref, w1_ref, b1_ref, w2t_ref, b2_ref, o_ref):
    # ---- Layer 1: Linear(img_dim, 128) + LeakyReLU(0.1) --------------------
    # x arrives as f32 (halves HBM input traffic vs. a wrapper-side bf16 pass);
    # the bf16 cast for the MXU is free VPU work here.
    x = x_ref[...].astype(jnp.bfloat16)
    h = jnp.dot(x, w1_ref[...], preferred_element_type=jnp.float32)   # (bm, 128)
    h = h + b1_ref[...]                                               # f32 bias
    h = jnp.where(h >= 0.0, h, 0.1 * h)                               # LeakyReLU(0.1)

    # ---- Layer 2: Linear(128, 1) + Sigmoid ----------------------------------
    # Attention-style A @ B^T with the sublane-padded transposed w2 so the MXU
    # emits a lane-dense (8, bm) block directly; only row 0 is the real logit.
    y = jax.lax.dot_general(
        w2t_ref[...], h.astype(jnp.bfloat16),
        dimension_numbers=(((1,), (1,)), ((), ())),
        preferred_element_type=jnp.float32)                           # (8, bm)
    logit = y[0:1, :] + b2_ref[0, 0]                                  # (1, bm)

    # Sigmoid on the real logits only; approx reciprocal runs on the EUP.
    sig = pl.reciprocal(1.0 + jnp.exp(-logit), approx=True)
    o_ref[...] = sig[None].astype(o_ref.dtype)                        # (1, 1, bm)


def _pick_bm(B, img_dim, block_b):
    """Batch-tile picker.

    Largest multiple of 16 that divides B (so no padded copy of x), capped by:
      * block_b (default 1024 rows),
      * a ~8 MiB budget for the double-buffered f32 x tile (safe under v5e's
        16 MiB default scoped VMEM; v6e/v7x default to 32 MiB),
      * B // 2 when B >= 256 so the grid keeps >= 2 steps and the "parallel"
        batch axis can shard across both v7x TensorCores.
    """
    rows_budget = (8 * 1024 * 1024) // (2 * 4 * max(img_dim, 1))
    cap = min(block_b, B, max(16, rows_budget))
    if B >= 256:
        cap = min(cap, B // 2)
    cap = max(16, (cap // 16) * 16)
    for bm in range(cap, 15, -16):
        if B % bm == 0:
            return bm, B                     # tile divides B: no padding needed
    # Ragged batch: fall back to padding x up to a tile multiple.
    # TODO(synk): handle the ragged tail with a masked last tile instead of a padded copy.
    bm = min(cap, 16 * ((B + 15) // 16))
    return bm, bm * ((B + bm - 1) // bm)


def discriminator_forward(x, params, *, block_b=1024):
    """x: (B, img_dim) f32.  params: output of prepare_discriminator_params.
    Returns (B, 1) f32 probabilities."""
    w1_bf, b1_f32, w2t_bf, b2_f32 = params
    B, img_dim = x.shape
    hidden = w1_bf.shape[1]

    bm, Bp = _pick_bm(B, img_dim, block_b)
    if Bp != B:
        x = jnp.pad(x, ((0, Bp - B), (0, 0)))
    n_tiles = Bp // bm

    out = pl.pallas_call(
        discriminator_kernel,
        out_shape=jax.ShapeDtypeStruct((n_tiles, 1, bm), jnp.float32),
        grid=(n_tiles,),
        in_specs=[
            # x: batch-tiled f32; weights/biases VMEM-resident across grid steps.
            pl.BlockSpec((bm, img_dim), lambda i: (i, 0)),
            pl.BlockSpec((img_dim, hidden), lambda i: (0, 0)),
            pl.BlockSpec((1, hidden), lambda i: (0, 0)),
            pl.BlockSpec((SUBLANES, hidden), lambda i: (0, 0)),
            pl.BlockSpec(memory_space=pltpu.MemorySpace.SMEM),        # b2 scalar
        ],
        # One lane-dense (1, bm) f32 logit row per grid step.
        out_specs=pl.BlockSpec((1, 1, bm), lambda i: (i, 0, 0)),
        compiler_params=pltpu.CompilerParams(
            dimension_semantics=("parallel",)),   # megacore-shardable batch axis
    )(x, w1_bf, b1_f32, w2t_bf, b2_f32)

    # Undo the transposed per-tile layout: tile i holds batch rows [i*bm,(i+1)*bm).
    return out.reshape(-1)[:B].reshape(B, 1)


def prepare_discriminator_params(w1, b1, w2, b2):
    """One-time (init / param-update-time) weight prep so the per-call wrapper
    does no weight-side XLA work:
      w1 -> bf16 (img_dim, 128);  b1 -> f32 (1, 128)
      w2 -> transposed, bf16, sublane-padded to (8, 128) (row 0 real)
      b2 -> f32 (1, 1) scalar (lives in SMEM inside the kernel)."""
    w1_bf = jnp.asarray(w1, jnp.float32).astype(jnp.bfloat16)
    b1_f32 = jnp.asarray(b1, jnp.float32).reshape(1, -1)
    hidden = w1_bf.shape[1]
    w2t = jnp.asarray(w2, jnp.float32).reshape(hidden, 1).T            # (1, hidden)
    w2t_bf = jnp.zeros((SUBLANES, hidden), jnp.bfloat16).at[0:1, :].set(
        w2t.astype(jnp.bfloat16))
    b2_f32 = jnp.asarray(b2, jnp.float32).reshape(1, 1)
    return w1_bf, b1_f32, w2t_bf, b2_f32


def init_discriminator_params(key, img_dim, hidden=HIDDEN):
    """Deterministic synthetic init (PyTorch Linear-style uniform bounds).
    Weights stored transposed vs. PyTorch: (in, out) so the kernel does x @ W."""
    k1, k2, k3, k4 = jax.random.split(key, 4)
    lim1 = 1.0 / jnp.sqrt(img_dim)
    lim2 = 1.0 / jnp.sqrt(hidden)
    w1 = jax.random.uniform(k1, (img_dim, hidden), jnp.float32, -lim1, lim1)
    b1 = jax.random.uniform(k2, (1, hidden), jnp.float32, -lim1, lim1)
    w2 = jax.random.uniform(k3, (hidden, 1), jnp.float32, -lim2, lim2)
    b2 = jax.random.uniform(k4, (1, 1), jnp.float32, -lim2, lim2)
    return w1, b1, w2, b2


if __name__ == "__main__":
    # MNIST-ish discriminator shapes: img_dim=784, hidden=128, batch=256
    # (real batch -> grid of 2 tiles of 128 rows; both v7x TCs get work).
    B, IMG_DIM = 256, 784

    key = jax.random.PRNGKey(0)
    kx, kp = jax.random.split(key)
    x = jax.random.normal(kx, (B, IMG_DIM), dtype=jnp.float32)
    w1, b1, w2, b2 = init_discriminator_params(kp, IMG_DIM)
    params = prepare_discriminator_params(w1, b1, w2, b2)

    out = discriminator_forward(x, params)
    out = jax.block_until_ready(out)

    # Pure-JAX reference, mirroring the kernel's bf16-operand / f32-accumulate
    # matmuls so the check can be tight.
    xb = x.astype(jnp.bfloat16).astype(jnp.float32)
    w1b = w1.astype(jnp.bfloat16).astype(jnp.float32)
    h_ref = xb @ w1b + b1
    h_ref = jnp.where(h_ref >= 0, h_ref, 0.1 * h_ref)
    hb = h_ref.astype(jnp.bfloat16).astype(jnp.float32)
    w2b = w2.astype(jnp.bfloat16).astype(jnp.float32)
    y_ref = 1.0 / (1.0 + jnp.exp(-(hb @ w2b + b2)))

    assert out.shape == (B, 1)
    assert jnp.allclose(out, y_ref, atol=2e-3, rtol=2e-3), float(
        jnp.max(jnp.abs(out - y_ref)))

    print("KERNEL_OK")
</pallas_src>

<mosaic_0001>
module attributes {stable_mosaic.version = 11 : i64} {
  func.func @discriminator_kernel(%arg0: i32, %arg1: memref<128x784xf32, #tpu.memory_space<vmem>>, %arg2: memref<784x128xbf16, #tpu.memory_space<vmem>>, %arg3: memref<1x128xf32, #tpu.memory_space<vmem>>, %arg4: memref<8x128xbf16, #tpu.memory_space<vmem>>, %arg5: memref<1x1xf32, #tpu.memory_space<smem>>, %arg6: memref<1x1x128xf32, #tpu.memory_space<vmem>>) attributes {dimension_semantics = [#tpu.dimension_semantics<parallel>], iteration_bounds = array<i64: 2>, scalar_prefetch = 0 : i64, scratch_operands = 0 : i64, tpu.core_type = #tpu.core_type<tc>, window_params = [{transform_indices = @transform_0, window_bounds = array<i64: 128, 784>}, {pipeline_mode = #tpu.pipeline_mode<synchronous>, transform_indices = @transform_1, window_bounds = array<i64: 784, 128>}, {pipeline_mode = #tpu.pipeline_mode<synchronous>, transform_indices = @transform_2, window_bounds = array<i64: 1, 128>}, {pipeline_mode = #tpu.pipeline_mode<synchronous>, transform_indices = @transform_3, window_bounds = array<i64: 8, 128>}, {transform_indices = @transform_4, window_bounds = array<i64: 1, 1>}, {transform_indices = @transform_5, window_bounds = array<i64: 1, 1, 128>}]} {
    %c0 = arith.constant 0 : index
    %c0_0 = arith.constant 0 : index
    %0 = vector.load %arg1[%c0, %c0_0] : memref<128x784xf32, #tpu.memory_space<vmem>>, vector<128x784xf32>
    %1 = arith.truncf %0 : vector<128x784xf32> to vector<128x784xbf16>
    %c0_1 = arith.constant 0 : index
    %c0_2 = arith.constant 0 : index
    %2 = vector.load %arg2[%c0_1, %c0_2] : memref<784x128xbf16, #tpu.memory_space<vmem>>, vector<784x128xbf16>
    %cst = arith.constant dense<0.000000e+00> : vector<128x128xf32>
    %3 = tpu.matmul %1, %2, %cst {dimension_numbers = #tpu.dot_dimension_numbers<[1], [0], [0], [1], [0, 0, 1, 1], [], []>} : vector<128x784xbf16>, vector<784x128xbf16>, vector<128x128xf32> -> vector<128x128xf32>
    %c0_3 = arith.constant 0 : index
    %c0_4 = arith.constant 0 : index
    %4 = vector.load %arg3[%c0_3, %c0_4] : memref<1x128xf32, #tpu.memory_space<vmem>>, vector<1x128xf32>
    %5 = vector.broadcast %4 : vector<1x128xf32> to vector<128x128xf32>
    %6 = arith.addf %3, %5 : vector<128x128xf32>
    %cst_5 = arith.constant 0.000000e+00 : f32
    %7 = vector.broadcast %cst_5 : f32 to vector<128x128xf32>
    %8 = arith.cmpf oge, %6, %7 : vector<128x128xf32>
    %cst_6 = arith.constant 1.000000e-01 : f32
    %9 = vector.broadcast %cst_6 : f32 to vector<128x128xf32>
    %10 = arith.mulf %9, %6 : vector<128x128xf32>
    %11 = arith.select %8, %6, %10 : vector<128x128xi1>, vector<128x128xf32>
    %c0_7 = arith.constant 0 : index
    %c0_8 = arith.constant 0 : index
    %12 = vector.load %arg4[%c0_7, %c0_8] : memref<8x128xbf16, #tpu.memory_space<vmem>>, vector<8x128xbf16>
    %13 = arith.truncf %11 : vector<128x128xf32> to vector<128x128xbf16>
    %cst_9 = arith.constant dense<0.000000e+00> : vector<8x128xf32>
    %14 = tpu.matmul %12, %13, %cst_9 {dimension_numbers = #tpu.dot_dimension_numbers<[1], [1], [0], [0], [0, 0, 1, 0], [], []>} : vector<8x128xbf16>, vector<128x128xbf16>, vector<8x128xf32> -> vector<8x128xf32>
    %15 = vector.extract_strided_slice %14 {offsets = [0, 0], sizes = [1, 128], strides = [1, 1]} : vector<8x128xf32> to vector<1x128xf32>
    %c0_10 = arith.constant 0 : index
    %c0_11 = arith.constant 0 : index
    %16 = memref.load %arg5[%c0_10, %c0_11] : memref<1x1xf32, #tpu.memory_space<smem>>
    %17 = vector.broadcast %16 : f32 to vector<1x128xf32>
    %18 = arith.addf %15, %17 : vector<1x128xf32>
    %cst_12 = arith.constant 0.000000e+00 : f32
    %19 = vector.broadcast %cst_12 : f32 to vector<1x128xf32>
    %20 = arith.subf %19, %18 : vector<1x128xf32>
    %21 = math.exp %20 : vector<1x128xf32>
    %cst_13 = arith.constant 1.000000e+00 : f32
    %22 = vector.broadcast %cst_13 : f32 to vector<1x128xf32>
    %23 = arith.addf %22, %21 : vector<1x128xf32>
    %24 = tpu.reciprocal %23 {approx = true} : vector<1x128xf32> -> vector<1x128xf32>
    %25 = vector.shape_cast %24 : vector<1x128xf32> to vector<1x1x128xf32>
    %c0_14 = arith.constant 0 : index
    %c0_15 = arith.constant 0 : index
    %c0_16 = arith.constant 0 : index
    %26 = vector.load %arg6[%c0_14, %c0_15, %c0_16] : memref<1x1x128xf32, #tpu.memory_space<vmem>>, vector<1x1x128xf32>
    tpu.vector_store %arg6[%c0_14, %c0_15, %c0_16], %25 {strides = array<i32>} : memref<1x1x128xf32, #tpu.memory_space<vmem>>, vector<1x1x128xf32>,
    return
  }
  func.func @transform_0(%arg0: i32) -> (i32, i32) {
    %c0_i32 = arith.constant 0 : i32
    %c0_i32_0 = arith.constant 0 : i32
    return %arg0, %c0_i32 : i32, i32
  }
  func.func @transform_1(%arg0: i32) -> (i32, i32) {
    %c0_i32 = arith.constant 0 : i32
    %c0_i32_0 = arith.constant 0 : i32
    %c0_i32_1 = arith.constant 0 : i32
    return %c0_i32, %c0_i32_0 : i32, i32
  }
  func.func @transform_2(%arg0: i32) -> (i32, i32) {
    %c0_i32 = arith.constant 0 : i32
    %c0_i32_0 = arith.constant 0 : i32
    %c0_i32_1 = arith.constant 0 : i32
    return %c0_i32, %c0_i32_0 : i32, i32
  }
  func.func @transform_3(%arg0: i32) -> (i32, i32) {
    %c0_i32 = arith.constant 0 : i32
    %c0_i32_0 = arith.constant 0 : i32
    %c0_i32_1 = arith.constant 0 : i32
    return %c0_i32, %c0_i32_0 : i32, i32
  }
  func.func @transform_4(%arg0: i32) -> (i32, i32) {
    %c0_i32 = arith.constant 0 : i32
    %c0_i32_0 = arith.constant 0 : i32
    %c0_i32_1 = arith.constant 0 : i32
    return %c0_i32, %c0_i32_0 : i32, i32
  }
  func.func @transform_5(%arg0: i32) -> (i32, i32, i32) {
    %c0_i32 = arith.constant 0 : i32
    %c0_i32_0 = arith.constant 0 : i32
    %c0_i32_1 = arith.constant 0 : i32
    return %arg0, %c0_i32, %c0_i32_0 : i32, i32, i32
  }
}

</mosaic_0001>

<llo_original>
// kernel: tpu_custom_call.1
$region0: #{tpu_custom_call.1}
  #allocation0 [shape = 'u32[]', space=smem, size = 0x4, offset = 0x4, fixed_abs, tag = 'smem constant byte address 0x4 - core index']
  #allocation1 [shape = 'u32[144,128]{1,0:T(1,128)}', space=vmem, size = 0x12000, scoped, tag = 'internal scratch']
  #allocation2 [shape = 'f32[1,1]{1,0:T(1,128)S(6)}', space=smem, size = 0x200, scoped, tag = 'scoped memory for tpu_custom_call.1']
  %s0 = inlined_call_operand.vmem [shape: f32[256,784], index: 0, kind: input, shape index: {}]
  %s1 = inlined_call_operand.vmem [shape: bf16[784,128], index: 1, kind: input, shape index: {}]
  %s2 = inlined_call_operand.vmem [shape: f32[1,128], index: 2, kind: input, shape index: {}]
  %s3 = inlined_call_operand.vmem [shape: bf16[8,128], index: 3, kind: input, shape index: {}]
  %s4 = inlined_call_operand.<no memory space> [shape: f32[1,1], index: 4, kind: input, shape index: {}]
  %s5 = inlined_call_operand.hbm [shape: f32[2,1,128], index: 5, kind: output, shape index: {}]
  %s6 = sld [smem:[#allocation0]]
  $region53: #{tpu_custom_call.1} parent=0
    _
  %s8 = ssub.s32 1, %s6
  %s9 = scalar_select 0, %s8, %s6
  %10 = sst [smem:[#allocation2]] %s4
  $region1: #{tpu_custom_call.1} parent=0
    #allocation3 [shape = 'u8[1024]{0}', space=vmem, size = 0x400, scoped, tag = 'output window, operand 0']
    #allocation4 [shape = 's32[2]{0}', space=sflag, size = 0x8, scoped, tag = 'scoped memory for tpu_custom_call.1']
    %11 = vsyncpa [#allocation4], 0
    %s12 = scalar_lea.sflag [#allocation4], 1
    %13 = vsyncpa %s12, 0
    loop: start=0, step=1, limit=4
    $region2: #{tpu_custom_call.1} parent=1 // loop_pre_header
      _
    $region3: #{tpu_custom_call.1} parent=1 // loop_header
      %s15 = sphi 0, %s19
      %p16 = scmp.ge.s32.totalorder %s15, 4
      %s25 = sphi 0, %s27
      %s28 = sphi 0, %s25
      %s29 = sphi 0, %s28
      %s45 = sphi 0, %s29
      %s49 = sphi 0, %s49
      %s51 = sphi 0, %s49
      %s52 = sphi 0, %s51
      %s66 = sphi 0, %s52
      %s70 = sphi 0, %s70
      %s72 = sphi 0, %s70
      %s73 = sphi 0, %s72
      %s87 = sphi 0, %s73
      %s91 = sphi 0, %s91
      %s93 = sphi 0, %s91
      %s94 = sphi 0, %s93
      %s108 = sphi 0, %s94
      %s112 = sphi 0, %s112
      %s114 = sphi 0, %s112
      %s115 = sphi 0, %s114
      %s129 = sphi 0, %s115
      %s135 = sphi 0, %s137
      %s138 = sphi 0, %s135
      %s139 = sphi 0, %s138
      %s155 = sphi 0, %s139
    $region4: #{tpu_custom_call.1} parent=1 // loop_header_branch
      %18 = sbr.rel (%p16) target = $region8
    $region5: #{tpu_custom_call.1} parent=1 // loop_body
      %s20 = ssub.s32 %s15, 1
      %s21 = ssub.s32 %s15, 2
      %s22 = sadd.s32 %s15, 1
      %s23 = ssub.s32 %s15, %s22
      %p24 = scmp.eq.s32.totalorder %s23, 0
      %s26 = sadd.s32 %s25, 1
      %s27 = scalar_select %p24, %s25, %s26
      %p30 = pneg %p24
      %p31 = scmp.eq.s32.totalorder %s15, 1
      %p32 = por %p30, %p31
      %p33 = scmp.ne.s32.totalorder %s25, %s28
      %p34 = scmp.eq.s32.totalorder %s15, 0
      %p35 = por %p33, %p34
      %p36 = scmp.ne.s32.totalorder %s25, %s28
      %p37 = scmp.eq.s32.totalorder %s20, 1
      %p38 = por %p36, %p37
      %p39 = scmp.ne.s32.totalorder %s28, %s29
      %p40 = scmp.eq.s32.totalorder %s20, 0
      %p41 = por %p39, %p40
      %p42 = scmp.ne.s32.totalorder %s28, %s29
      %p43 = scmp.eq.s32.totalorder %s21, 1
      %p44 = por %p42, %p43
      %p46 = scmp.ne.s32.totalorder %s29, %s45
      %p47 = scmp.eq.s32.totalorder %s21, 0
      %p48 = por %p46, %p47
      %s50 = sadd.s32 %s49, 1
      %p53 = scmp.eq.s32.totalorder %s15, 1
      %p54 = scmp.ne.s32.totalorder %s49, %s51
      %p55 = scmp.eq.s32.totalorder %s15, 0
      %p56 = por %p54, %p55
      %p57 = scmp.ne.s32.totalorder %s49, %s51
      %p58 = scmp.eq.s32.totalorder %s20, 1
      %p59 = por %p57, %p58
      %p60 = scmp.ne.s32.totalorder %s51, %s52
      %p61 = scmp.eq.s32.totalorder %s20, 0
      %p62 = por %p60, %p61
      %p63 = scmp.ne.s32.totalorder %s51, %s52
      %p64 = scmp.eq.s32.totalorder %s21, 1
      %p65 = por %p63, %p64
      %p67 = scmp.ne.s32.totalorder %s52, %s66
      %p68 = scmp.eq.s32.totalorder %s21, 0
      %p69 = por %p67, %p68
      %s71 = sadd.s32 %s70, 1
      %p74 = scmp.eq.s32.totalorder %s15, 1
      %p75 = scmp.ne.s32.totalorder %s70, %s72
      %p76 = scmp.eq.s32.totalorder %s15, 0
      %p77 = por %p75, %p76
      %p78 = scmp.ne.s32.totalorder %s70, %s72
      %p79 = scmp.eq.s32.totalorder %s20, 1
      %p80 = por %p78, %p79
      %p81 = scmp.ne.s32.totalorder %s72, %s73
      %p82 = scmp.eq.s32.totalorder %s20, 0
      %p83 = por %p81, %p82
      %p84 = scmp.ne.s32.totalorder %s72, %s73
      %p85 = scmp.eq.s32.totalorder %s21, 1
      %p86 = por %p84, %p85
      %p88 = scmp.ne.s32.totalorder %s73, %s87
      %p89 = scmp.eq.s32.totalorder %s21, 0
      %p90 = por %p88, %p89
      %s92 = sadd.s32 %s91, 1
      %p95 = scmp.eq.s32.totalorder %s15, 1
      %p96 = scmp.ne.s32.totalorder %s91, %s93
      %p97 = scmp.eq.s32.totalorder %s15, 0
      %p98 = por %p96, %p97
      %p99 = scmp.ne.s32.totalorder %s91, %s93
      %p100 = scmp.eq.s32.totalorder %s20, 1
      %p101 = por %p99, %p100
      %p102 = scmp.ne.s32.totalorder %s93, %s94
      %p103 = scmp.eq.s32.totalorder %s20, 0
      %p104 = por %p102, %p103
      %p105 = scmp.ne.s32.totalorder %s93, %s94
      %p106 = scmp.eq.s32.totalorder %s21, 1
      %p107 = por %p105, %p106
      %p109 = scmp.ne.s32.totalorder %s94, %s108
      %p110 = scmp.eq.s32.totalorder %s21, 0
      %p111 = por %p109, %p110
      %s113 = sadd.s32 %s112, 1
      %p116 = scmp.eq.s32.totalorder %s15, 1
      %p117 = scmp.ne.s32.totalorder %s112, %s114
      %p118 = scmp.eq.s32.totalorder %s15, 0
      %p119 = por %p117, %p118
      %p120 = scmp.ne.s32.totalorder %s112, %s114
      %p121 = scmp.eq.s32.totalorder %s20, 1
      %p122 = por %p120, %p121
      %p123 = scmp.ne.s32.totalorder %s114, %s115
      %p124 = scmp.eq.s32.totalorder %s20, 0
      %p125 = por %p123, %p124
      %p126 = scmp.ne.s32.totalorder %s114, %s115
      %p127 = scmp.eq.s32.totalorder %s21, 1
      %p128 = por %p126, %p127
      %p130 = scmp.ne.s32.totalorder %s115, %s129
      %p131 = scmp.eq.s32.totalorder %s21, 0
      %p132 = por %p130, %p131
      %s133 = ssub.s32 %s15, %s22
      %p134 = scmp.eq.s32.totalorder %s133, 0
      %s136 = sadd.s32 %s135, 1
      %s137 = scalar_select %p134, %s135, %s136
      %p140 = pneg %p134
      %p141 = scmp.eq.s32.totalorder %s15, 1
      %p142 = por %p140, %p141
      %p143 = scmp.ne.s32.totalorder %s135, %s138
      %p144 = scmp.eq.s32.totalorder %s15, 0
      %p145 = por %p143, %p144
      %p146 = scmp.ne.s32.totalorder %s135, %s138
      %p147 = scmp.eq.s32.totalorder %s20, 1
      %p148 = por %p146, %p147
      %p149 = scmp.ne.s32.totalorder %s138, %s139
      %p150 = scmp.eq.s32.totalorder %s20, 0
      %p151 = por %p149, %p150
      %p152 = scmp.ne.s32.totalorder %s138, %s139
      %p153 = scmp.eq.s32.totalorder %s21, 1
      %p154 = por %p152, %p153
      %p156 = scmp.ne.s32.totalorder %s139, %s155
      %p157 = scmp.eq.s32.totalorder %s21, 0
      %p158 = por %p156, %p157
      %p159 = scmp.le.s32.totalorder 1, %s15
      %p160 = scmp.lt.s32.totalorder %s15, 3
      %p161 = pnand %p159, %p160
      %p162 = pneg %p161
      // Predicated region
      $region9: #{tpu_custom_call.1} parent=5 // pred_check
        _
      $region10: #{tpu_custom_call.1} parent=5 // pred_check_branch
        %164 = sbr.rel (%p161) target = $region12
      $region11: #{tpu_custom_call.1} parent=5 // pred_region
        %s165 = ssub.s32 %s15, 1
        // Predicated region
        $region13: #{tpu_custom_call.1} parent=11 // pred_check
          %p166 = pneg %p62
        $region14: #{tpu_custom_call.1} parent=11 // pred_check_branch
          %168 = sbr.rel (%p166) target = $region16
        $region15: #{tpu_custom_call.1} parent=11 // pred_region
          _
        $region16: #{tpu_custom_call.1} parent=11 // pred_fallthru
          _
        // Predicated region
        $region17: #{tpu_custom_call.1} parent=11 // pred_check
          %p169 = pneg %p83
        $region18: #{tpu_custom_call.1} parent=11 // pred_check_branch
          %171 = sbr.rel (%p169) target = $region20
        $region19: #{tpu_custom_call.1} parent=11 // pred_region
          _
        $region20: #{tpu_custom_call.1} parent=11 // pred_fallthru
          _
        // Predicated region
        $region21: #{tpu_custom_call.1} parent=11 // pred_check
          %p172 = pneg %p104
        $region22: #{tpu_custom_call.1} parent=11 // pred_check_branch
          %174 = sbr.rel (%p172) target = $region24
        $region23: #{tpu_custom_call.1} parent=11 // pred_region
          _
        $region24: #{tpu_custom_call.1} parent=11 // pred_fallthru
          _
        // Predicated region
        $region25: #{tpu_custom_call.1} parent=11 // pred_check
          %p175 = pneg %p125
        $region26: #{tpu_custom_call.1} parent=11 // pred_check_branch
          %177 = sbr.rel (%p175) target = $region28
        $region27: #{tpu_custom_call.1} parent=11 // pred_region
          _
        $region28: #{tpu_custom_call.1} parent=11 // pred_fallthru
          _
      $region12: #{tpu_custom_call.1} parent=5 // pred_fallthru
        _
      %p178 = scmp.lt.s32.totalorder %s15, 2
      // Predicated region
      $region29: #{tpu_custom_call.1} parent=5 // pred_check
        %p179 = pneg %p178
      $region30: #{tpu_custom_call.1} parent=5 // pred_check_branch
        %181 = sbr.rel (%p179) target = $region32
      $region31: #{tpu_custom_call.1} parent=5 // pred_region
        // Predicated region
        $region33: #{tpu_custom_call.1} parent=31 // pred_check
          %p182 = pneg %p35
        $region34: #{tpu_custom_call.1} parent=31 // pred_check_branch
          %184 = sbr.rel (%p182) target = $region36
        $region35: #{tpu_custom_call.1} parent=31 // pred_region
          %s185 = smul.u32 16, %s15
          %p186 = scmp.lt.s32.totalorder %s185, 31
          %s187 = scalar_select %p186, %s185, 31
          %s188 = smul.addr %s187, 7
          %s189 = smul.addr %s188, 8
          %s190 = scalar_lea.vmem %s0, %s189
          %s191 = smul.u32 16, %s15
        $region36: #{tpu_custom_call.1} parent=31 // pred_fallthru
          _
      $region32: #{tpu_custom_call.1} parent=5 // pred_fallthru
        _
      %p192 = scmp.le.s32.totalorder 1, %s15
      %p193 = scmp.lt.s32.totalorder %s15, 3
      %p194 = pnand %p192, %p193
      %p195 = pneg %p194
      // Predicated region
      $region37: #{tpu_custom_call.1} parent=5 // pred_check
        _
      $region38: #{tpu_custom_call.1} parent=5 // pred_check_branch
        %197 = sbr.rel (%p194) target = $region40
      $region39: #{tpu_custom_call.1} parent=5 // pred_region
        %s198 = ssub.s32 %s15, 1
        %s199 = smul.u32 16, %s20
        %p200 = scmp.lt.s32.totalorder %s199, 31
        %s201 = scalar_select %p200, %s199, 31
        %s202 = smul.addr %s201, 7
        %s203 = smul.addr %s202, 8
        %s204 = scalar_lea.vmem %s0, %s203
        %p205 = pneg %p41
        %p206 = pneg %p38
        %p207 = pneg %p62
        %p208 = pneg %p59
        %p209 = pneg %p83
        %p210 = pneg %p80
        %p211 = pneg %p104
        %p212 = pneg %p101
        %p213 = pneg %p125
        %p214 = pneg %p122
        %p215 = pneg %p151
        %p216 = pneg %p148
        %s217 = sand.u32 %s138, 1
        %s218 = scalar_lea.sflag [#allocation4], %s217
        %s219 = sand.u32 %s138, 1
        %s220 = scalar_lea.vmem [#allocation3], %s219
        %s221 = smul.u32 16, %s20
        %p222 = scmp.lt.s32.totalorder %s221, 31
        %s223 = scalar_select %p222, %s221, 31
        %s224 = smul.addr %s223, 7
        %s225 = smul.addr %s224, 8
        %s226 = scalar_lea.vmem %s0, %s225
        %s227 = smul.u32 16, %s20
        %v229 = vld [vmem:[%s226] sm:$0xff]
        %v230 = vld [vmem:[%s226 + $0x8] sm:$0xff]
        %v231 = vld [vmem:[%s226 + $0x10] sm:$0xff]
        %v232 = vld [vmem:[%s226 + $0x18] sm:$0xff]
        %v233 = vld [vmem:[%s226 + $0x20] sm:$0xff]
        %v234 = vld [vmem:[%s226 + $0x28] sm:$0xff]
        %v235 = vld [vmem:[%s226 + $0x30] sm:$0xff]
        %v236 = vld [vmem:[%s226 + $0x38] sm:$0xff]
        %v237 = vld [vmem:[%s226 + $0x40] sm:$0xff]
        %v238 = vld [vmem:[%s226 + $0x48] sm:$0xff]
        %v239 = vld [vmem:[%s226 + $0x50] sm:$0xff]
        %v240 = vld [vmem:[%s226 + $0x58] sm:$0xff]
        %v241 = vld [vmem:[%s226 + $0x60] sm:$0xff]
        %v242 = vld [vmem:[%s226 + $0x68] sm:$0xff]
        %v243 = vld [vmem:[%s226 + $0x70] sm:$0xff]
        %v244 = vld [vmem:[%s226 + $0x78] sm:$0xff]
        %v245 = vld [vmem:[%s226 + $0x80] sm:$0xff]
        %v246 = vld [vmem:[%s226 + $0x88] sm:$0xff]
        %v247 = vld [vmem:[%s226 + $0x90] sm:$0xff]
        %v248 = vld [vmem:[%s226 + $0x98] sm:$0xff]
        %v249 = vld [vmem:[%s226 + $0xa0] sm:$0xff]
        %v250 = vld [vmem:[%s226 + $0xa8] sm:$0xff]
        %v251 = vld [vmem:[%s226 + $0xb0] sm:$0xff]
        %v252 = vld [vmem:[%s226 + $0xb8] sm:$0xff]
        %v253 = vld [vmem:[%s226 + $0xc0] sm:$0xff]
        %v254 = vld [vmem:[%s226 + $0xc8] sm:$0xff]
        %v255 = vld [vmem:[%s226 + $0xd0] sm:$0xff]
        %v256 = vld [vmem:[%s226 + $0xd8] sm:$0xff]
        %v257 = vld [vmem:[%s226 + $0xe0] sm:$0xff]
        %v258 = vld [vmem:[%s226 + $0xe8] sm:$0xff]
        %v259 = vld [vmem:[%s226 + $0xf0] sm:$0xff]
        %v260 = vld [vmem:[%s226 + $0xf8] sm:$0xff]
        %v261 = vld [vmem:[%s226 + $0x100] sm:$0xff]
        %v262 = vld [vmem:[%s226 + $0x108] sm:$0xff]
        %v263 = vld [vmem:[%s226 + $0x110] sm:$0xff]
        %v264 = vld [vmem:[%s226 + $0x118] sm:$0xff]
        %v265 = vld [vmem:[%s226 + $0x120] sm:$0xff]
        %v266 = vld [vmem:[%s226 + $0x128] sm:$0xff]
        %v267 = vld [vmem:[%s226 + $0x130] sm:$0xff]
        %v268 = vld [vmem:[%s226 + $0x138] sm:$0xff]
        %v269 = vld [vmem:[%s226 + $0x140] sm:$0xff]
        %v270 = vld [vmem:[%s226 + $0x148] sm:$0xff]
        %v271 = vld [vmem:[%s226 + $0x150] sm:$0xff]
        %v272 = vld [vmem:[%s226 + $0x158] sm:$0xff]
        %v273 = vld [vmem:[%s226 + $0x160] sm:$0xff]
        %v274 = vld [vmem:[%s226 + $0x168] sm:$0xff]
        %v275 = vld [vmem:[%s226 + $0x170] sm:$0xff]
        %v276 = vld [vmem:[%s226 + $0x178] sm:$0xff]
        %v277 = vld [vmem:[%s226 + $0x180] sm:$0xff]
        %v278 = vld [vmem:[%s226 + $0x188] sm:$0xff]
        %v279 = vld [vmem:[%s226 + $0x190] sm:$0xff]
        %v280 = vld [vmem:[%s226 + $0x198] sm:$0xff]
        %v281 = vld [vmem:[%s226 + $0x1a0] sm:$0xff]
        %v282 = vld [vmem:[%s226 + $0x1a8] sm:$0xff]
        %v283 = vld [vmem:[%s226 + $0x1b0] sm:$0xff]
        %v284 = vld [vmem:[%s226 + $0x1b8] sm:$0xff]
        %v285 = vld [vmem:[%s226 + $0x1c0] sm:$0xff]
        %v286 = vld [vmem:[%s226 + $0x1c8] sm:$0xff]
        %v287 = vld [vmem:[%s226 + $0x1d0] sm:$0xff]
        %v288 = vld [vmem:[%s226 + $0x1d8] sm:$0xff]
        %v289 = vld [vmem:[%s226 + $0x1e0] sm:$0xff]
        %v290 = vld [vmem:[%s226 + $0x1e8] sm:$0xff]
        %v291 = vld [vmem:[%s226 + $0x1f0] sm:$0xff]
        %v292 = vld [vmem:[%s226 + $0x1f8] sm:$0xff]
        %v293 = vld [vmem:[%s226 + $0x200] sm:$0xff]
        %v294 = vld [vmem:[%s226 + $0x208] sm:$0xff]
        %v295 = vld [vmem:[%s226 + $0x210] sm:$0xff]
        %v296 = vld [vmem:[%s226 + $0x218] sm:$0xff]
        %v297 = vld [vmem:[%s226 + $0x220] sm:$0xff]
        %v298 = vld [vmem:[%s226 + $0x228] sm:$0xff]
        %v299 = vld [vmem:[%s226 + $0x230] sm:$0xff]
        %v300 = vld [vmem:[%s226 + $0x238] sm:$0xff]
        %v301 = vld [vmem:[%s226 + $0x240] sm:$0xff]
        %v302 = vld [vmem:[%s226 + $0x248] sm:$0xff]
        %v303 = vld [vmem:[%s226 + $0x250] sm:$0xff]
        %v304 = vld [vmem:[%s226 + $0x258] sm:$0xff]
        %v305 = vld [vmem:[%s226 + $0x260] sm:$0xff]
        %v306 = vld [vmem:[%s226 + $0x268] sm:$0xff]
        %v307 = vld [vmem:[%s226 + $0x270] sm:$0xff]
        %v308 = vld [vmem:[%s226 + $0x278] sm:$0xff]
        %v309 = vld [vmem:[%s226 + $0x280] sm:$0xff]
        %v310 = vld [vmem:[%s226 + $0x288] sm:$0xff]
        %v311 = vld [vmem:[%s226 + $0x290] sm:$0xff]
        %v312 = vld [vmem:[%s226 + $0x298] sm:$0xff]
        %v313 = vld [vmem:[%s226 + $0x2a0] sm:$0xff]
        %v314 = vld [vmem:[%s226 + $0x2a8] sm:$0xff]
        %v315 = vld [vmem:[%s226 + $0x2b0] sm:$0xff]
        %v316 = vld [vmem:[%s226 + $0x2b8] sm:$0xff]
        %v317 = vld [vmem:[%s226 + $0x2c0] sm:$0xff]
        %v318 = vld [vmem:[%s226 + $0x2c8] sm:$0xff]
        %v319 = vld [vmem:[%s226 + $0x2d0] sm:$0xff]
        %v320 = vld [vmem:[%s226 + $0x2d8] sm:$0xff]
        %v321 = vld [vmem:[%s226 + $0x2e0] sm:$0xff]
        %v322 = vld [vmem:[%s226 + $0x2e8] sm:$0xff]
        %v323 = vld [vmem:[%s226 + $0x2f0] sm:$0xff]
        %v324 = vld [vmem:[%s226 + $0x2f8] sm:$0xff]
        %v325 = vld [vmem:[%s226 + $0x300] sm:$0xff]
        %v326 = vld [vmem:[%s226 + $0x308] sm:$0xff]
        %v327 = vld [vmem:[%s226 + $0x310] sm:$0xff]
        %v328 = vld [vmem:[%s226 + $0x318] sm:$0xff]
        %v329 = vld [vmem:[%s226 + $0x320] sm:$0xff]
        %v330 = vld [vmem:[%s226 + $0x328] sm:$0xff]
        %v331 = vld [vmem:[%s226 + $0x330] sm:$0xff]
        %v332 = vld [vmem:[%s226 + $0x338] sm:$0xff]
        %v333 = vld [vmem:[%s226 + $0x340] sm:$0xff]
        %v334 = vld [vmem:[%s226 + $0x348] sm:$0xff]
        %v335 = vld [vmem:[%s226 + $0x350] sm:$0xff]
        %v336 = vld [vmem:[%s226 + $0x358] sm:$0xff]
        %v337 = vld [vmem:[%s226 + $0x360] sm:$0xff]
        %v338 = vld [vmem:[%s226 + $0x368] sm:$0xff]
        %v339 = vld [vmem:[%s226 + $0x370] sm:$0xff]
        %v340 = vld [vmem:[%s226 + $0x378] sm:$0xff]
        %v341 = vpack.c.bf16 %v236, %v229
        %v342 = vpack.c.bf16 %v237, %v230
        %v343 = vpack.c.bf16 %v238, %v231
        %v344 = vpack.c.bf16 %v239, %v232
        %v345 = vpack.c.bf16 %v240, %v233
        %v346 = vpack.c.bf16 %v241, %v234
        %v347 = vpack.c.bf16 %v242, %v235
        %v348 = vpack.c.bf16 %v250, %v243
        %v349 = vpack.c.bf16 %v251, %v244
        %v350 = vpack.c.bf16 %v252, %v245
        %v351 = vpack.c.bf16 %v253, %v246
        %v352 = vpack.c.bf16 %v254, %v247
        %v353 = vpack.c.bf16 %v255, %v248
        %v354 = vpack.c.bf16 %v256, %v249
        %v355 = vpack.c.bf16 %v264, %v257
        %v356 = vpack.c.bf16 %v265, %v258
        %v357 = vpack.c.bf16 %v266, %v259
        %v358 = vpack.c.bf16 %v267, %v260
        %v359 = vpack.c.bf16 %v268, %v261
        %v360 = vpack.c.bf16 %v269, %v262
        %v361 = vpack.c.bf16 %v270, %v263
        %v362 = vpack.c.bf16 %v278, %v271
        %v363 = vpack.c.bf16 %v279, %v272
        %v364 = vpack.c.bf16 %v280, %v273
        %v365 = vpack.c.bf16 %v281, %v274
        %v366 = vpack.c.bf16 %v282, %v275
        %v367 = vpack.c.bf16 %v283, %v276
        %v368 = vpack.c.bf16 %v284, %v277
        %v369 = vpack.c.bf16 %v292, %v285
        %v370 = vpack.c.bf16 %v293, %v286
        %v371 = vpack.c.bf16 %v294, %v287
        %v372 = vpack.c.bf16 %v295, %v288
        %v373 = vpack.c.bf16 %v296, %v289
        %v374 = vpack.c.bf16 %v297, %v290
        %v375 = vpack.c.bf16 %v298, %v291
        %v376 = vpack.c.bf16 %v306, %v299
        %v377 = vpack.c.bf16 %v307, %v300
        %v378 = vpack.c.bf16 %v308, %v301
        %v379 = vpack.c.bf16 %v309, %v302
        %v380 = vpack.c.bf16 %v310, %v303
        %v381 = vpack.c.bf16 %v311, %v304
        %v382 = vpack.c.bf16 %v312, %v305
        %v383 = vpack.c.bf16 %v320, %v313
        %v384 = vpack.c.bf16 %v321, %v314
        %v385 = vpack.c.bf16 %v322, %v315
        %v386 = vpack.c.bf16 %v323, %v316
        %v387 = vpack.c.bf16 %v324, %v317
        %v388 = vpack.c.bf16 %v325, %v318
        %v389 = vpack.c.bf16 %v326, %v319
        %v390 = vpack.c.bf16 %v334, %v327
        %v391 = vpack.c.bf16 %v335, %v328
        %v392 = vpack.c.bf16 %v336, %v329
        %v393 = vpack.c.bf16 %v337, %v330
        %v394 = vpack.c.bf16 %v338, %v331
        %v395 = vpack.c.bf16 %v339, %v332
        %v396 = vpack.c.bf16 %v340, %v333
        %v397 = vld [vmem:[%s1] sm:$0xf]
        %v398 = vld [vmem:[%s1 + $0x4] sm:$0xf]
        %v399 = vld [vmem:[%s1 + $0x8] sm:$0xf]
        %v400 = vld [vmem:[%s1 + $0xc] sm:$0xf]
        %v401 = vld [vmem:[%s1 + $0x10] sm:$0xf]
        %v402 = vld [vmem:[%s1 + $0x14] sm:$0xf]
        %v403 = vld [vmem:[%s1 + $0x18] sm:$0xf]
        %v404 = vld [vmem:[%s1 + $0x1c] sm:$0xf]
        %v405 = vld [vmem:[%s1 + $0x20] sm:$0xf]
        %v406 = vld [vmem:[%s1 + $0x24] sm:$0xf]
        %v407 = vld [vmem:[%s1 + $0x28] sm:$0xf]
        %v408 = vld [vmem:[%s1 + $0x2c] sm:$0xf]
        %v409 = vld [vmem:[%s1 + $0x30] sm:$0xf]
        %v410 = vld [vmem:[%s1 + $0x34] sm:$0xf]
        %v411 = vld [vmem:[%s1 + $0x38] sm:$0xf]
        %v412 = vld [vmem:[%s1 + $0x3c] sm:$0xf]
        %v413 = vld [vmem:[%s1 + $0x40] sm:$0xf]
        %v414 = vld [vmem:[%s1 + $0x44] sm:$0xf]
        %v415 = vld [vmem:[%s1 + $0x48] sm:$0xf]
        %v416 = vld [vmem:[%s1 + $0x4c] sm:$0xf]
        %v417 = vld [vmem:[%s1 + $0x50] sm:$0xf]
        %v418 = vld [vmem:[%s1 + $0x54] sm:$0xf]
        %v419 = vld [vmem:[%s1 + $0x58] sm:$0xf]
        %v420 = vld [vmem:[%s1 + $0x5c] sm:$0xf]
        %v421 = vld [vmem:[%s1 + $0x60] sm:$0xf]
        %v422 = vld [vmem:[%s1 + $0x64] sm:$0xf]
        %v423 = vld [vmem:[%s1 + $0x68] sm:$0xf]
        %v424 = vld [vmem:[%s1 + $0x6c] sm:$0xf]
        %v425 = vld [vmem:[%s1 + $0x70] sm:$0xf]
        %v426 = vld [vmem:[%s1 + $0x74] sm:$0xf]
        %v427 = vld [vmem:[%s1 + $0x78] sm:$0xf]
        %v428 = vld [vmem:[%s1 + $0x7c] sm:$0xf]
        %v429 = vld [vmem:[%s1 + $0x80] sm:$0xf]
        %v430 = vld [vmem:[%s1 + $0x84] sm:$0xf]
        %v431 = vld [vmem:[%s1 + $0x88] sm:$0xf]
        %v432 = vld [vmem:[%s1 + $0x8c] sm:$0xf]
        %v433 = vld [vmem:[%s1 + $0x90] sm:$0xf]
        %v434 = vld [vmem:[%s1 + $0x94] sm:$0xf]
        %v435 = vld [vmem:[%s1 + $0x98] sm:$0xf]
        %v436 = vld [vmem:[%s1 + $0x9c] sm:$0xf]
        %v437 = vld [vmem:[%s1 + $0xa0] sm:$0xf]
        %v438 = vld [vmem:[%s1 + $0xa4] sm:$0xf]
        %v439 = vld [vmem:[%s1 + $0xa8] sm:$0xf]
        %v440 = vld [vmem:[%s1 + $0xac] sm:$0xf]
        %v441 = vld [vmem:[%s1 + $0xb0] sm:$0xf]
        %v442 = vld [vmem:[%s1 + $0xb4] sm:$0xf]
        %v443 = vld [vmem:[%s1 + $0xb8] sm:$0xf]
        %v444 = vld [vmem:[%s1 + $0xbc] sm:$0xf]
        %v445 = vld [vmem:[%s1 + $0xc0] sm:$0xf]
        %v446 = vld [vmem:[%s1 + $0xc4] sm:$0xf]
        %v447 = vld [vmem:[%s1 + $0xc8] sm:$0xf]
        %v448 = vld [vmem:[%s1 + $0xcc] sm:$0xf]
        %v449 = vld [vmem:[%s1 + $0xd0] sm:$0xf]
        %v450 = vld [vmem:[%s1 + $0xd4] sm:$0xf]
        %v451 = vld [vmem:[%s1 + $0xd8] sm:$0xf]
        %v452 = vld [vmem:[%s1 + $0xdc] sm:$0xf]
        %v453 = vld [vmem:[%s1 + $0xe0] sm:$0xf]
        %v454 = vld [vmem:[%s1 + $0xe4] sm:$0xf]
        %v455 = vld [vmem:[%s1 + $0xe8] sm:$0xf]
        %v456 = vld [vmem:[%s1 + $0xec] sm:$0xf]
        %v457 = vld [vmem:[%s1 + $0xf0] sm:$0xf]
        %v458 = vld [vmem:[%s1 + $0xf4] sm:$0xf]
        %v459 = vld [vmem:[%s1 + $0xf8] sm:$0xf]
        %v460 = vld [vmem:[%s1 + $0xfc] sm:$0xf]
        %v461 = vld [vmem:[%s1 + $0x100] sm:$0xf]
        %v462 = vld [vmem:[%s1 + $0x104] sm:$0xf]
        %v463 = vld [vmem:[%s1 + $0x108] sm:$0xf]
        %v464 = vld [vmem:[%s1 + $0x10c] sm:$0xf]
        %v465 = vld [vmem:[%s1 + $0x110] sm:$0xf]
        %v466 = vld [vmem:[%s1 + $0x114] sm:$0xf]
        %v467 = vld [vmem:[%s1 + $0x118] sm:$0xf]
        %v468 = vld [vmem:[%s1 + $0x11c] sm:$0xf]
        %v469 = vld [vmem:[%s1 + $0x120] sm:$0xf]
        %v470 = vld [vmem:[%s1 + $0x124] sm:$0xf]
        %v471 = vld [vmem:[%s1 + $0x128] sm:$0xf]
        %v472 = vld [vmem:[%s1 + $0x12c] sm:$0xf]
        %v473 = vld [vmem:[%s1 + $0x130] sm:$0xf]
        %v474 = vld [vmem:[%s1 + $0x134] sm:$0xf]
        %v475 = vld [vmem:[%s1 + $0x138] sm:$0xf]
        %v476 = vld [vmem:[%s1 + $0x13c] sm:$0xf]
        %v477 = vld [vmem:[%s1 + $0x140] sm:$0xf]
        %v478 = vld [vmem:[%s1 + $0x144] sm:$0xf]
        %v479 = vld [vmem:[%s1 + $0x148] sm:$0xf]
        %v480 = vld [vmem:[%s1 + $0x14c] sm:$0xf]
        %v481 = vld [vmem:[%s1 + $0x150] sm:$0xf]
        %v482 = vld [vmem:[%s1 + $0x154] sm:$0xf]
        %v483 = vld [vmem:[%s1 + $0x158] sm:$0xf]
        %v484 = vld [vmem:[%s1 + $0x15c] sm:$0xf]
        %v485 = vld [vmem:[%s1 + $0x160] sm:$0xf]
        %v486 = vld [vmem:[%s1 + $0x164] sm:$0xf]
        %v487 = vld [vmem:[%s1 + $0x168] sm:$0xf]
        %v488 = vld [vmem:[%s1 + $0x16c] sm:$0xf]
        %v489 = vld [vmem:[%s1 + $0x170] sm:$0xf]
        %v490 = vld [vmem:[%s1 + $0x174] sm:$0xf]
        %v491 = vld [vmem:[%s1 + $0x178] sm:$0xf]
        %v492 = vld [vmem:[%s1 + $0x17c] sm:$0xf]
        %v493 = vld [vmem:[%s1 + $0x180] sm:$0xf]
        %v494 = vld [vmem:[%s1 + $0x184] sm:$0xf]
        %v495 = vld [vmem:[%s2] sm:$0x1]
        %v497 = vlaneseq
        %v498 = vshrl.u32 %v497, 7
        %v499 = vsub.s32 0, %v498
        %v500 = vrot.slane %v495, %v499
        %v600 = vunpack.c.l.b16 %v397
        %v601 = vunpack.c.l.b16 %v398
        %v602 = vunpack.c.l.b16 %v399
        %v603 = vunpack.c.l.b16 %v400
        %v604 = vunpack.c.l.b16 %v401
        %v605 = vunpack.c.l.b16 %v402
        %v606 = vunpack.c.l.b16 %v403
        %v607 = vunpack.c.l.b16 %v404
        %v608 = vunpack.c.l.b16 %v405
        %v609 = vunpack.c.l.b16 %v406
        %v610 = vunpack.c.l.b16 %v407
        %v611 = vunpack.c.l.b16 %v408
        %v612 = vunpack.c.l.b16 %v409
        %v613 = vunpack.c.l.b16 %v410
        %v614 = vunpack.c.l.b16 %v411
        %v615 = vunpack.c.l.b16 %v412
        %v616 = vunpack.c.l.b16 %v413
        %v617 = vunpack.c.l.b16 %v414
        %v618 = vunpack.c.l.b16 %v415
        %v619 = vunpack.c.l.b16 %v416
        %v620 = vunpack.c.l.b16 %v417
        %v621 = vunpack.c.l.b16 %v418
        %v622 = vunpack.c.l.b16 %v419
        %v623 = vunpack.c.l.b16 %v420
        %v624 = vunpack.c.l.b16 %v421
        %v625 = vunpack.c.l.b16 %v422
        %v626 = vunpack.c.l.b16 %v423
        %v627 = vunpack.c.l.b16 %v424
        %v628 = vunpack.c.l.b16 %v425
        %v629 = vunpack.c.l.b16 %v426
        %v630 = vunpack.c.l.b16 %v427
        %v631 = vunpack.c.l.b16 %v428
        %v632 = vunpack.c.l.b16 %v429
        %v633 = vunpack.c.l.b16 %v430
        %v634 = vunpack.c.l.b16 %v431
        %v635 = vunpack.c.l.b16 %v432
        %v636 = vunpack.c.l.b16 %v433
        %v637 = vunpack.c.l.b16 %v434
        %v638 = vunpack.c.l.b16 %v435
        %v639 = vunpack.c.l.b16 %v436
        %v640 = vunpack.c.l.b16 %v437
        %v641 = vunpack.c.l.b16 %v438
        %v642 = vunpack.c.l.b16 %v439
        %v643 = vunpack.c.l.b16 %v440
        %v644 = vunpack.c.l.b16 %v441
        %v645 = vunpack.c.l.b16 %v442
        %v646 = vunpack.c.l.b16 %v443
        %v647 = vunpack.c.l.b16 %v444
        %v648 = vunpack.c.l.b16 %v445
        %v649 = vunpack.c.l.b16 %v446
        %v650 = vunpack.c.l.b16 %v447
        %v651 = vunpack.c.l.b16 %v448
        %v652 = vunpack.c.l.b16 %v449
        %v653 = vunpack.c.l.b16 %v450
        %v654 = vunpack.c.l.b16 %v451
        %v655 = vunpack.c.l.b16 %v452
        %v656 = vunpack.c.l.b16 %v453
        %v657 = vunpack.c.l.b16 %v454
        %v658 = vunpack.c.l.b16 %v455
        %v659 = vunpack.c.l.b16 %v456
        %v660 = vunpack.c.l.b16 %v457
        %v661 = vunpack.c.l.b16 %v458
        %v662 = vunpack.c.l.b16 %v459
        %v663 = vunpack.c.l.b16 %v460
        %v664 = vunpack.c.l.b16 %v461
        %v665 = vunpack.c.l.b16 %v462
        %v666 = vunpack.c.l.b16 %v463
        %v667 = vunpack.c.l.b16 %v464
        %v668 = vunpack.c.l.b16 %v465
        %v669 = vunpack.c.l.b16 %v466
        %v670 = vunpack.c.l.b16 %v467
        %v671 = vunpack.c.l.b16 %v468
        %v672 = vunpack.c.l.b16 %v469
        %v673 = vunpack.c.l.b16 %v470
        %v674 = vunpack.c.l.b16 %v471
        %v675 = vunpack.c.l.b16 %v472
        %v676 = vunpack.c.l.b16 %v473
        %v677 = vunpack.c.l.b16 %v474
        %v678 = vunpack.c.l.b16 %v475
        %v679 = vunpack.c.l.b16 %v476
        %v680 = vunpack.c.l.b16 %v477
        %v681 = vunpack.c.l.b16 %v478
        %v682 = vunpack.c.l.b16 %v479
        %v683 = vunpack.c.l.b16 %v480
        %v684 = vunpack.c.l.b16 %v481
        %v685 = vunpack.c.l.b16 %v482
        %v686 = vunpack.c.l.b16 %v483
        %v687 = vunpack.c.l.b16 %v484
        %v688 = vunpack.c.l.b16 %v485
        %v689 = vunpack.c.l.b16 %v486
        %v690 = vunpack.c.l.b16 %v487
        %v691 = vunpack.c.l.b16 %v488
        %v692 = vunpack.c.l.b16 %v489
        %v693 = vunpack.c.l.b16 %v490
        %v694 = vunpack.c.l.b16 %v491
        %v695 = vunpack.c.l.b16 %v492
        %v696 = vunpack.c.l.b16 %v493
        %v697 = vunpack.c.l.b16 %v494
        %v698 = vpack.c.b16 %v601, %v600
        %v699 = vpack.c.b16 %v603, %v602
        %v700 = vpack.c.b16 %v605, %v604
        %v701 = vpack.c.b16 %v607, %v606
        %v702 = vpack.c.b16 %v609, %v608
        %v703 = vpack.c.b16 %v611, %v610
        %v704 = vpack.c.b16 %v613, %v612
        %v705 = vpack.c.b16 %v615, %v614
        %v706 = vpack.c.b16 %v617, %v616
        %v707 = vpack.c.b16 %v619, %v618
        %v708 = vpack.c.b16 %v621, %v620
        %v709 = vpack.c.b16 %v623, %v622
        %v710 = vpack.c.b16 %v625, %v624
        %v711 = vpack.c.b16 %v627, %v626
        %v712 = vpack.c.b16 %v629, %v628
        %v713 = vpack.c.b16 %v631, %v630
        %v714 = vpack.c.b16 %v633, %v632
        %v715 = vpack.c.b16 %v635, %v634
        %v716 = vpack.c.b16 %v637, %v636
        %v717 = vpack.c.b16 %v639, %v638
        %v718 = vpack.c.b16 %v641, %v640
        %v719 = vpack.c.b16 %v643, %v642
        %v720 = vpack.c.b16 %v645, %v644
        %v721 = vpack.c.b16 %v647, %v646
        %v722 = vpack.c.b16 %v649, %v648
        %v723 = vpack.c.b16 %v651, %v650
        %v724 = vpack.c.b16 %v653, %v652
        %v725 = vpack.c.b16 %v655, %v654
        %v726 = vpack.c.b16 %v657, %v656
        %v727 = vpack.c.b16 %v659, %v658
        %v728 = vpack.c.b16 %v661, %v660
        %v729 = vpack.c.b16 %v663, %v662
        %v730 = vpack.c.b16 %v665, %v664
        %v731 = vpack.c.b16 %v667, %v666
        %v732 = vpack.c.b16 %v669, %v668
        %v733 = vpack.c.b16 %v671, %v670
        %v734 = vpack.c.b16 %v673, %v672
        %v735 = vpack.c.b16 %v675, %v674
        %v736 = vpack.c.b16 %v677, %v676
        %v737 = vpack.c.b16 %v679, %v678
        %v738 = vpack.c.b16 %v681, %v680
        %v739 = vpack.c.b16 %v683, %v682
        %v740 = vpack.c.b16 %v685, %v684
        %v741 = vpack.c.b16 %v687, %v686
        %v742 = vpack.c.b16 %v689, %v688
        %v743 = vpack.c.b16 %v691, %v690
        %v744 = vpack.c.b16 %v693, %v692
        %v745 = vpack.c.b16 %v695, %v694
        %v746 = vpack.c.b16 %v697, %v696
        %vm796 = vcmask 130048
        %v798 = vsel %vm796, %v347, 0
        %v801 = vsel %vm796, %v354, 0
        %v804 = vsel %vm796, %v361, 0
        %v807 = vsel %vm796, %v368, 0
        %v810 = vsel %vm796, %v375, 0
        %v813 = vsel %vm796, %v382, 0
        %v816 = vsel %vm796, %v389, 0
        %v819 = vsel %vm796, %v396, 0
        %821 = vmatprep.subr.bf16.mxu0 0
        %822 = vmatpush1.bf16.msra.mxu0 %v698
        %823 = vmatprep.subr.bf16.mxu0 0
        %824 = vmatpush1.bf16.msra.mxu0 %v699
        %825 = vmatprep.subr.bf16.mxu0 0
        %826 = vmatpush1.bf16.msra.mxu0 %v700
        %827 = vmatprep.subr.bf16.mxu0 0
        %828 = vmatpush1.bf16.msra.mxu0 %v701
        %829 = vmatprep.subr.bf16.mxu0 0
        %830 = vmatpush1.bf16.msra.mxu0 %v702
        %831 = vmatprep.subr.bf16.mxu0 0
        %832 = vmatpush1.bf16.msra.mxu0 %v703
        %833 = vmatprep.subr.bf16.mxu0 0
        %834 = vmatpush1.bf16.msra.mxu0 %v704
        %835 = vmatprep.subr.bf16.mxu0 0
        %836 = vmatpush1.bf16.msra.mxu0 %v705
        %837 = vmatprep.subr.bf16.mxu0 0
        %838 = vmatpush1.bf16.msra.mxu0 %v706
        %839 = vmatprep.subr.bf16.mxu0 0
        %840 = vmatpush1.bf16.msra.mxu0 %v707
        %841 = vmatprep.subr.bf16.mxu0 0
        %842 = vmatpush1.bf16.msra.mxu0 %v708
        %843 = vmatprep.subr.bf16.mxu0 0
        %844 = vmatpush1.bf16.msra.mxu0 %v709
        %845 = vmatprep.subr.bf16.mxu0 0
        %846 = vmatpush1.bf16.msra.mxu0 %v710
        %847 = vmatprep.subr.bf16.mxu0 0
        %848 = vmatpush1.bf16.msra.mxu0 %v711
        %849 = vmatprep.subr.bf16.mxu0 0
        %850 = vmatpush1.bf16.msra.mxu0 %v712
        %851 = vmatprep.subr.bf16.mxu0 0
        %852 = vmatpush1.bf16.msra.mxu0 %v713
        %853 = vmatprep.mubr.bf16.mxu0 %v342
        %854 = vmatmul.mubr.bf16.gmra.mrb[0].mxu0 %v341
        %v855 = vpop.f32.mrb[0].mxu0
        %v856 = vadd.f32 %v500, %v855
        %v857 = vpop.f32.mrb[0].mxu0
        %v858 = vpop.f32.mrb[0].mxu0
        %v859 = vadd.f32 %v500, %v858
        %v860 = vpop.f32.mrb[0].mxu0
        %861 = vmatprep.mubr.bf16.mxu0 %v349
        %862 = vmatmul.mubr.bf16.gmra.mrb[0].mxu0 %v348
        %v863 = vpop.f32.mrb[0].mxu0
        %v864 = vadd.f32 %v500, %v863
        %v865 = vpop.f32.mrb[0].mxu0
        %v866 = vpop.f32.mrb[0].mxu0
        %v867 = vadd.f32 %v500, %v866
        %v868 = vpop.f32.mrb[0].mxu0
        %869 = vmatprep.mubr.bf16.mxu0 %v356
        %870 = vmatmul.mubr.bf16.gmra.mrb[0].mxu0 %v355
        %v871 = vpop.f32.mrb[0].mxu0
        %v872 = vadd.f32 %v500, %v871
        %v873 = vpop.f32.mrb[0].mxu0
        %v874 = vpop.f32.mrb[0].mxu0
        %v875 = vadd.f32 %v500, %v874
        %v876 = vpop.f32.mrb[0].mxu0
        %877 = vmatprep.mubr.bf16.mxu0 %v363
        %878 = vmatmul.mubr.bf16.gmra.mrb[0].mxu0 %v362
        %v879 = vpop.f32.mrb[0].mxu0
        %v880 = vadd.f32 %v500, %v879
        %v881 = vpop.f32.mrb[0].mxu0
        %v882 = vpop.f32.mrb[0].mxu0
        %v883 = vadd.f32 %v500, %v882
        %v884 = vpop.f32.mrb[0].mxu0
        %885 = vmatprep.mubr.bf16.mxu0 %v370
        %886 = vmatmul.mubr.bf16.gmra.mrb[0].mxu0 %v369
        %v887 = vpop.f32.mrb[0].mxu0
        %v888 = vadd.f32 %v500, %v887
        %v889 = vpop.f32.mrb[0].mxu0
        %v890 = vpop.f32.mrb[0].mxu0
        %v891 = vadd.f32 %v500, %v890
        %v892 = vpop.f32.mrb[0].mxu0
        %893 = vmatprep.mubr.bf16.mxu0 %v377
        %894 = vmatmul.mubr.bf16.gmra.mrb[0].mxu0 %v376
        %v895 = vpop.f32.mrb[0].mxu0
        %v896 = vadd.f32 %v500, %v895
        %v897 = vpop.f32.mrb[0].mxu0
        %v898 = vpop.f32.mrb[0].mxu0
        %v899 = vadd.f32 %v500, %v898
        %v900 = vpop.f32.mrb[0].mxu0
        %901 = vmatprep.mubr.bf16.mxu0 %v384
        %902 = vmatmul.mubr.bf16.gmra.mrb[0].mxu0 %v383
        %v903 = vpop.f32.mrb[0].mxu0
        %v904 = vadd.f32 %v500, %v903
        %v905 = vpop.f32.mrb[0].mxu0
        %v906 = vpop.f32.mrb[0].mxu0
        %v907 = vadd.f32 %v500, %v906
        %v908 = vpop.f32.mrb[0].mxu0
        %909 = vmatprep.mubr.bf16.mxu0 %v391
        %910 = vmatmul.mubr.bf16.gmra.mrb[0].mxu0 %v390
        %v911 = vpop.f32.mrb[0].mxu0
        %v912 = vadd.f32 %v500, %v911
        %v913 = vpop.f32.mrb[0].mxu0
        %v914 = vpop.f32.mrb[0].mxu0
        %v915 = vadd.f32 %v500, %v914
        %v916 = vpop.f32.mrb[0].mxu0
        %917 = vdwg.mxu0
        %918 = vmatprep.subr.bf16.mxu0 0
        %919 = vmatpush1.bf16.msra.mxu0 %v714
        %920 = vmatprep.subr.bf16.mxu0 0
        %921 = vmatpush1.bf16.msra.mxu0 %v715
        %922 = vmatprep.subr.bf16.mxu0 0
        %923 = vmatpush1.bf16.msra.mxu0 %v716
        %924 = vmatprep.subr.bf16.mxu0 0
        %925 = vmatpush1.bf16.msra.mxu0 %v717
        %926 = vmatprep.subr.bf16.mxu0 0
        %927 = vmatpush1.bf16.msra.mxu0 %v718
        %928 = vmatprep.subr.bf16.mxu0 0
        %929 = vmatpush1.bf16.msra.mxu0 %v719
        %930 = vmatprep.subr.bf16.mxu0 0
        %931 = vmatpush1.bf16.msra.mxu0 %v720
        %932 = vmatprep.subr.bf16.mxu0 0
        %933 = vmatpush1.bf16.msra.mxu0 %v721
        %934 = vmatprep.subr.bf16.mxu0 0
        %935 = vmatpush1.bf16.msra.mxu0 %v722
        %936 = vmatprep.subr.bf16.mxu0 0
        %937 = vmatpush1.bf16.msra.mxu0 %v723
        %938 = vmatprep.subr.bf16.mxu0 0
        %939 = vmatpush1.bf16.msra.mxu0 %v724
        %940 = vmatprep.subr.bf16.mxu0 0
        %941 = vmatpush1.bf16.msra.mxu0 %v725
        %942 = vmatprep.subr.bf16.mxu0 0
        %943 = vmatpush1.bf16.msra.mxu0 %v726
        %944 = vmatprep.subr.bf16.mxu0 0
        %945 = vmatpush1.bf16.msra.mxu0 %v727
        %946 = vmatprep.subr.bf16.mxu0 0
        %947 = vmatpush1.bf16.msra.mxu0 %v728
        %948 = vmatprep.subr.bf16.mxu0 0
        %949 = vmatpush1.bf16.msra.mxu0 %v729
        %950 = vmatprep.mubr.bf16.mxu0 %v344
        %951 = vmatmul.mubr.bf16.gmra.mrb[0].mxu0 %v343
        %v952 = vpop.f32.mrb[0].mxu0
        %v953 = vadd.f32 %v856, %v952
        %v954 = vpop.f32.mrb[0].mxu0
        %v955 = vpop.f32.mrb[0].mxu0
        %v956 = vadd.f32 %v859, %v955
        %v957 = vpop.f32.mrb[0].mxu0
        %958 = vmatprep.mubr.bf16.mxu0 %v351
        %959 = vmatmul.mubr.bf16.gmra.mrb[0].mxu0 %v350
        %v960 = vpop.f32.mrb[0].mxu0
        %v961 = vadd.f32 %v864, %v960
        %v962 = vpop.f32.mrb[0].mxu0
        %v963 = vpop.f32.mrb[0].mxu0
        %v964 = vadd.f32 %v867, %v963
        %v965 = vpop.f32.mrb[0].mxu0
        %966 = vmatprep.mubr.bf16.mxu0 %v358
        %967 = vmatmul.mubr.bf16.gmra.mrb[0].mxu0 %v357
        %v968 = vpop.f32.mrb[0].mxu0
        %v969 = vadd.f32 %v872, %v968
        %v970 = vpop.f32.mrb[0].mxu0
        %v971 = vpop.f32.mrb[0].mxu0
        %v972 = vadd.f32 %v875, %v971
        %v973 = vpop.f32.mrb[0].mxu0
        %974 = vmatprep.mubr.bf16.mxu0 %v365
        %975 = vmatmul.mubr.bf16.gmra.mrb[0].mxu0 %v364
        %v976 = vpop.f32.mrb[0].mxu0
        %v977 = vadd.f32 %v880, %v976
        %v978 = vpop.f32.mrb[0].mxu0
        %v979 = vpop.f32.mrb[0].mxu0
        %v980 = vadd.f32 %v883, %v979
        %v981 = vpop.f32.mrb[0].mxu0
        %982 = vmatprep.mubr.bf16.mxu0 %v372
        %983 = vmatmul.mubr.bf16.gmra.mrb[0].mxu0 %v371
        %v984 = vpop.f32.mrb[0].mxu0
        %v985 = vadd.f32 %v888, %v984
        %v986 = vpop.f32.mrb[0].mxu0
        %v987 = vpop.f32.mrb[0].mxu0
        %v988 = vadd.f32 %v891, %v987
        %v989 = vpop.f32.mrb[0].mxu0
        %990 = vmatprep.mubr.bf16.mxu0 %v379
        %991 = vmatmul.mubr.bf16.gmra.mrb[0].mxu0 %v378
        %v992 = vpop.f32.mrb[0].mxu0
        %v993 = vadd.f32 %v896, %v992
        %v994 = vpop.f32.mrb[0].mxu0
        %v995 = vpop.f32.mrb[0].mxu0
        %v996 = vadd.f32 %v899, %v995
        %v997 = vpop.f32.mrb[0].mxu0
        %998 = vmatprep.mubr.bf16.mxu0 %v386
        %999 = vmatmul.mubr.bf16.gmra.mrb[0].mxu0 %v385
        %v1000 = vpop.f32.mrb[0].mxu0
        %v1001 = vadd.f32 %v904, %v1000
        %v1002 = vpop.f32.mrb[0].mxu0
        %v1003 = vpop.f32.mrb[0].mxu0
        %v1004 = vadd.f32 %v907, %v1003
        %v1005 = vpop.f32.mrb[0].mxu0
        %1006 = vmatprep.mubr.bf16.mxu0 %v393
        %1007 = vmatmul.mubr.bf16.gmra.mrb[0].mxu0 %v392
        %v1008 = vpop.f32.mrb[0].mxu0
        %v1009 = vadd.f32 %v912, %v1008
        %v1010 = vpop.f32.mrb[0].mxu0
        %v1011 = vpop.f32.mrb[0].mxu0
        %v1012 = vadd.f32 %v915, %v1011
        %v1013 = vpop.f32.mrb[0].mxu0
        %1014 = vdwg.mxu0
        %1015 = vmatprep.subr.bf16.mxu0 0
        %1016 = vmatpush1.bf16.msra.mxu0 %v730
        %1017 = vmatprep.subr.bf16.mxu0 0
        %1018 = vmatpush1.bf16.msra.mxu0 %v731
        %1019 = vmatprep.subr.bf16.mxu0 0
        %1020 = vmatpush1.bf16.msra.mxu0 %v732
        %1021 = vmatprep.subr.bf16.mxu0 0
        %1022 = vmatpush1.bf16.msra.mxu0 %v733
        %1023 = vmatprep.subr.bf16.mxu0 0
        %1024 = vmatpush1.bf16.msra.mxu0 %v734
        %1025 = vmatprep.subr.bf16.mxu0 0
        %1026 = vmatpush1.bf16.msra.mxu0 %v735
        %1027 = vmatprep.subr.bf16.mxu0 0
        %1028 = vmatpush1.bf16.msra.mxu0 %v736
        %1029 = vmatprep.subr.bf16.mxu0 0
        %1030 = vmatpush1.bf16.msra.mxu0 %v737
        %1031 = vmatprep.subr.bf16.mxu0 0
        %1032 = vmatpush1.bf16.msra.mxu0 %v738
        %1033 = vmatprep.subr.bf16.mxu0 0
        %1034 = vmatpush1.bf16.msra.mxu0 %v739
        %1035 = vmatprep.subr.bf16.mxu0 0
        %1036 = vmatpush1.bf16.msra.mxu0 %v740
        %1037 = vmatprep.subr.bf16.mxu0 0
        %1038 = vmatpush1.bf16.msra.mxu0 %v741
        %1039 = vmatprep.subr.bf16.mxu0 0
        %1040 = vmatpush1.bf16.msra.mxu0 %v742
        %1041 = vmatprep.subr.bf16.mxu0 0
        %1042 = vmatpush1.bf16.msra.mxu0 %v743
        %1043 = vmatprep.subr.bf16.mxu0 0
        %1044 = vmatpush1.bf16.msra.mxu0 %v744
        %1045 = vmatprep.subr.bf16.mxu0 0
        %1046 = vmatpush1.bf16.msra.mxu0 %v745
        %1047 = vmatprep.mubr.bf16.mxu0 %v346
        %1048 = vmatmul.mubr.bf16.gmra.mrb[0].mxu0 %v345
        %v1049 = vpop.f32.mrb[0].mxu0
        %v1050 = vadd.f32 %v953, %v1049
        %v1051 = vpop.f32.mrb[0].mxu0
        %v1052 = vpop.f32.mrb[0].mxu0
        %v1053 = vadd.f32 %v956, %v1052
        %v1054 = vpop.f32.mrb[0].mxu0
        %1055 = vmatprep.mubr.bf16.mxu0 %v353
        %1056 = vmatmul.mubr.bf16.gmra.mrb[0].mxu0 %v352
        %v1057 = vpop.f32.mrb[0].mxu0
        %v1058 = vadd.f32 %v961, %v1057
        %v1059 = vpop.f32.mrb[0].mxu0
        %v1060 = vpop.f32.mrb[0].mxu0
        %v1061 = vadd.f32 %v964, %v1060
        %v1062 = vpop.f32.mrb[0].mxu0
        %1063 = vmatprep.mubr.bf16.mxu0 %v360
        %1064 = vmatmul.mubr.bf16.gmra.mrb[0].mxu0 %v359
        %v1065 = vpop.f32.mrb[0].mxu0
        %v1066 = vadd.f32 %v969, %v1065
        %v1067 = vpop.f32.mrb[0].mxu0
        %v1068 = vpop.f32.mrb[0].mxu0
        %v1069 = vadd.f32 %v972, %v1068
        %v1070 = vpop.f32.mrb[0].mxu0
        %1071 = vmatprep.mubr.bf16.mxu0 %v367
        %1072 = vmatmul.mubr.bf16.gmra.mrb[0].mxu0 %v366
        %v1073 = vpop.f32.mrb[0].mxu0
        %v1074 = vadd.f32 %v977, %v1073
        %v1075 = vpop.f32.mrb[0].mxu0
        %v1076 = vpop.f32.mrb[0].mxu0
        %v1077 = vadd.f32 %v980, %v1076
        %v1078 = vpop.f32.mrb[0].mxu0
        %1079 = vmatprep.mubr.bf16.mxu0 %v374
        %1080 = vmatmul.mubr.bf16.gmra.mrb[0].mxu0 %v373
        %v1081 = vpop.f32.mrb[0].mxu0
        %v1082 = vadd.f32 %v985, %v1081
        %v1083 = vpop.f32.mrb[0].mxu0
        %v1084 = vpop.f32.mrb[0].mxu0
        %v1085 = vadd.f32 %v988, %v1084
        %v1086 = vpop.f32.mrb[0].mxu0
        %1087 = vmatprep.mubr.bf16.mxu0 %v381
        %1088 = vmatmul.mubr.bf16.gmra.mrb[0].mxu0 %v380
        %v1089 = vpop.f32.mrb[0].mxu0
        %v1090 = vadd.f32 %v993, %v1089
        %v1091 = vpop.f32.mrb[0].mxu0
        %v1092 = vpop.f32.mrb[0].mxu0
        %v1093 = vadd.f32 %v996, %v1092
        %v1094 = vpop.f32.mrb[0].mxu0
        %1095 = vmatprep.mubr.bf16.mxu0 %v388
        %1096 = vmatmul.mubr.bf16.gmra.mrb[0].mxu0 %v387
        %v1097 = vpop.f32.mrb[0].mxu0
        %v1098 = vadd.f32 %v1001, %v1097
        %v1099 = vpop.f32.mrb[0].mxu0
        %v1100 = vpop.f32.mrb[0].mxu0
        %v1101 = vadd.f32 %v1004, %v1100
        %v1102 = vpop.f32.mrb[0].mxu0
        %1103 = vmatprep.mubr.bf16.mxu0 %v395
        %1104 = vmatmul.mubr.bf16.gmra.mrb[0].mxu0 %v394
        %v1105 = vpop.f32.mrb[0].mxu0
        %v1106 = vadd.f32 %v1009, %v1105
        %v1107 = vpop.f32.mrb[0].mxu0
        %v1108 = vpop.f32.mrb[0].mxu0
        %v1109 = vadd.f32 %v1012, %v1108
        %v1110 = vpop.f32.mrb[0].mxu0
        %1111 = vdwg.mxu0
        %1112 = vmatprep.subr.bf16.mxu0 0
        %1113 = vmatpush1.bf16.msra.mxu0 %v746
        %1114 = vmatprep.subr.bf16.mxu0 0
        %1115 = vmatpush1.bf16.msra.mxu0 0
        %1116 = vmatprep.subr.bf16.mxu0 0
        %1117 = vmatpush1.bf16.msra.mxu0 0
        %1118 = vmatprep.subr.bf16.mxu0 0
        %1119 = vmatpush1.bf16.msra.mxu0 0
        %1120 = vmatprep.subr.bf16.mxu0 0
        %1121 = vmatpush1.bf16.msra.mxu0 0
        %1122 = vmatprep.subr.bf16.mxu0 0
        %1123 = vmatpush1.bf16.msra.mxu0 0
        %1124 = vmatprep.subr.bf16.mxu0 0
        %1125 = vmatpush1.bf16.msra.mxu0 0
        %1126 = vmatprep.subr.bf16.mxu0 0
        %1127 = vmatpush1.bf16.msra.mxu0 0
        %1128 = vmatprep.subr.bf16.mxu0 0
        %1129 = vmatpush1.bf16.msra.mxu0 0
        %1130 = vmatprep.subr.bf16.mxu0 0
        %1131 = vmatpush1.bf16.msra.mxu0 0
        %1132 = vmatprep.subr.bf16.mxu0 0
        %1133 = vmatpush1.bf16.msra.mxu0 0
        %1134 = vmatprep.subr.bf16.mxu0 0
        %1135 = vmatpush1.bf16.msra.mxu0 0
        %1136 = vmatprep.subr.bf16.mxu0 0
        %1137 = vmatpush1.bf16.msra.mxu0 0
        %1138 = vmatprep.subr.bf16.mxu0 0
        %1139 = vmatpush1.bf16.msra.mxu0 0
        %1140 = vmatprep.subr.bf16.mxu0 0
        %1141 = vmatpush1.bf16.msra.mxu0 0
        %1142 = vmatprep.subr.bf16.mxu0 0
        %1143 = vmatpush1.bf16.msra.mxu0 0
        %1144 = vmatprep.mubr.bf16.mxu0 0
        %1145 = vmatmul.mubr.bf16.gmra.mrb[0].mxu0 %v798
        %v1146 = vpop.f32.mrb[0].mxu0
        %v1147 = vadd.f32 %v1050, %v1146
        %v1148 = vpop.f32.mrb[0].mxu0
        %v1149 = vpop.f32.mrb[0].mxu0
        %v1150 = vadd.f32 %v1053, %v1149
        %v1151 = vpop.f32.mrb[0].mxu0
        %1152 = vmatprep.mubr.bf16.mxu0 0
        %1153 = vmatmul.mubr.bf16.gmra.mrb[0].mxu0 %v801
        %v1154 = vpop.f32.mrb[0].mxu0
        %v1155 = vadd.f32 %v1058, %v1154
        %v1156 = vpop.f32.mrb[0].mxu0
        %v1157 = vpop.f32.mrb[0].mxu0
        %v1158 = vadd.f32 %v1061, %v1157
        %v1159 = vpop.f32.mrb[0].mxu0
        %1160 = vmatprep.mubr.bf16.mxu0 0
        %1161 = vmatmul.mubr.bf16.gmra.mrb[0].mxu0 %v804
        %v1162 = vpop.f32.mrb[0].mxu0
        %v1163 = vadd.f32 %v1066, %v1162
        %v1164 = vpop.f32.mrb[0].mxu0
        %v1165 = vpop.f32.mrb[0].mxu0
        %v1166 = vadd.f32 %v1069, %v1165
        %v1167 = vpop.f32.mrb[0].mxu0
        %1168 = vmatprep.mubr.bf16.mxu0 0
        %1169 = vmatmul.mubr.bf16.gmra.mrb[0].mxu0 %v807
        %v1170 = vpop.f32.mrb[0].mxu0
        %v1171 = vadd.f32 %v1074, %v1170
        %v1172 = vpop.f32.mrb[0].mxu0
        %v1173 = vpop.f32.mrb[0].mxu0
        %v1174 = vadd.f32 %v1077, %v1173
        %v1175 = vpop.f32.mrb[0].mxu0
        %1176 = vmatprep.mubr.bf16.mxu0 0
        %1177 = vmatmul.mubr.bf16.gmra.mrb[0].mxu0 %v810
        %v1178 = vpop.f32.mrb[0].mxu0
        %v1179 = vadd.f32 %v1082, %v1178
        %v1180 = vpop.f32.mrb[0].mxu0
        %v1181 = vpop.f32.mrb[0].mxu0
        %v1182 = vadd.f32 %v1085, %v1181
        %v1183 = vpop.f32.mrb[0].mxu0
        %1184 = vmatprep.mubr.bf16.mxu0 0
        %1185 = vmatmul.mubr.bf16.gmra.mrb[0].mxu0 %v813
        %v1186 = vpop.f32.mrb[0].mxu0
        %v1187 = vadd.f32 %v1090, %v1186
        %v1188 = vpop.f32.mrb[0].mxu0
        %v1189 = vpop.f32.mrb[0].mxu0
        %v1190 = vadd.f32 %v1093, %v1189
        %v1191 = vpop.f32.mrb[0].mxu0
        %1192 = vmatprep.mubr.bf16.mxu0 0
        %1193 = vmatmul.mubr.bf16.gmra.mrb[0].mxu0 %v816
        %v1194 = vpop.f32.mrb[0].mxu0
        %v1195 = vadd.f32 %v1098, %v1194
        %v1196 = vpop.f32.mrb[0].mxu0
        %v1197 = vpop.f32.mrb[0].mxu0
        %v1198 = vadd.f32 %v1101, %v1197
        %v1199 = vpop.f32.mrb[0].mxu0
        %1200 = vmatprep.mubr.bf16.mxu0 0
        %1201 = vmatmul.mubr.bf16.gmra.mrb[0].mxu0 %v819
        %v1202 = vpop.f32.mrb[0].mxu0
        %v1203 = vadd.f32 %v1106, %v1202
        %v1204 = vpop.f32.mrb[0].mxu0
        %v1205 = vpop.f32.mrb[0].mxu0
        %v1206 = vadd.f32 %v1109, %v1205
        %v1207 = vpop.f32.mrb[0].mxu0
        %1208 = vdwg.mxu0
        %vm1209 = vcmp.ge.f32.partialorder %v1147, 0.0
        %vm1210 = vcmp.ge.f32.partialorder %v1150, 0.0
        %vm1211 = vcmp.ge.f32.partialorder %v1155, 0.0
        %vm1212 = vcmp.ge.f32.partialorder %v1158, 0.0
        %vm1213 = vcmp.ge.f32.partialorder %v1163, 0.0
        %vm1214 = vcmp.ge.f32.partialorder %v1166, 0.0
        %vm1215 = vcmp.ge.f32.partialorder %v1171, 0.0
        %vm1216 = vcmp.ge.f32.partialorder %v1174, 0.0
        %vm1217 = vcmp.ge.f32.partialorder %v1179, 0.0
        %vm1218 = vcmp.ge.f32.partialorder %v1182, 0.0
        %vm1219 = vcmp.ge.f32.partialorder %v1187, 0.0
        %vm1220 = vcmp.ge.f32.partialorder %v1190, 0.0
        %vm1221 = vcmp.ge.f32.partialorder %v1195, 0.0
        %vm1222 = vcmp.ge.f32.partialorder %v1198, 0.0
        %vm1223 = vcmp.ge.f32.partialorder %v1203, 0.0
        %vm1224 = vcmp.ge.f32.partialorder %v1206, 0.0
        %v1225 = vmul.f32 %v1147, 0.1
        %v1226 = vmul.f32 %v1150, 0.1
        %v1227 = vmul.f32 %v1155, 0.1
        %v1228 = vmul.f32 %v1158, 0.1
        %v1229 = vmul.f32 %v1163, 0.1
        %v1230 = vmul.f32 %v1166, 0.1
        %v1231 = vmul.f32 %v1171, 0.1
        %v1232 = vmul.f32 %v1174, 0.1
        %v1233 = vmul.f32 %v1179, 0.1
        %v1234 = vmul.f32 %v1182, 0.1
        %v1235 = vmul.f32 %v1187, 0.1
        %v1236 = vmul.f32 %v1190, 0.1
        %v1237 = vmul.f32 %v1195, 0.1
        %v1238 = vmul.f32 %v1198, 0.1
        %v1239 = vmul.f32 %v1203, 0.1
        %v1240 = vmul.f32 %v1206, 0.1
        %v1241 = vsel %vm1209, %v1147, %v1225
        %v1242 = vsel %vm1210, %v1150, %v1226
        %v1243 = vsel %vm1211, %v1155, %v1227
        %v1244 = vsel %vm1212, %v1158, %v1228
        %v1245 = vsel %vm1213, %v1163, %v1229
        %v1246 = vsel %vm1214, %v1166, %v1230
        %v1247 = vsel %vm1215, %v1171, %v1231
        %v1248 = vsel %vm1216, %v1174, %v1232
        %v1249 = vsel %vm1217, %v1179, %v1233
        %v1250 = vsel %vm1218, %v1182, %v1234
        %v1251 = vsel %vm1219, %v1187, %v1235
        %v1252 = vsel %vm1220, %v1190, %v1236
        %v1253 = vsel %vm1221, %v1195, %v1237
        %v1254 = vsel %vm1222, %v1198, %v1238
        %v1255 = vsel %vm1223, %v1203, %v1239
        %v1256 = vsel %vm1224, %v1206, %v1240
        %v1257 = vld [vmem:[%s3] sm:$0xf]
        %v1258 = vpack.c.bf16 %v1242, %v1241
        %v1259 = vpack.c.bf16 %v1244, %v1243
        %v1260 = vpack.c.bf16 %v1246, %v1245
        %v1261 = vpack.c.bf16 %v1248, %v1247
        %v1262 = vpack.c.bf16 %v1250, %v1249
        %v1263 = vpack.c.bf16 %v1252, %v1251
        %v1264 = vpack.c.bf16 %v1254, %v1253
        %v1265 = vpack.c.bf16 %v1256, %v1255
        %1266 = vmatprep.subr.bf16.mxu0 0
        %1267 = vmatpush1.bf16.xpose.msra.mxu0 %v1258
        %1268 = vmatprep.subr.bf16.mxu0 0
        %1269 = vmatpush1.bf16.xpose.msra.mxu0 %v1259
        %1270 = vmatprep.subr.bf16.mxu0 0
        %1271 = vmatpush1.bf16.xpose.msra.mxu0 %v1260
        %1272 = vmatprep.subr.bf16.mxu0 0
        %1273 = vmatpush1.bf16.xpose.msra.mxu0 %v1261
        %1274 = vmatprep.subr.bf16.mxu0 0
        %1275 = vmatpush1.bf16.xpose.msra.mxu0 %v1262
        %1276 = vmatprep.subr.bf16.mxu0 0
        %1277 = vmatpush1.bf16.xpose.msra.mxu0 %v1263
        %1278 = vmatprep.subr.bf16.mxu0 0
        %1279 = vmatpush1.bf16.xpose.msra.mxu0 %v1264
        %1280 = vmatprep.subr.bf16.mxu0 0
        %1281 = vmatpush1.bf16.xpose.msra.mxu0 %v1265
        %1282 = vmatprep.subr.bf16.mxu0 0
        %1283 = vmatpush1.bf16.xpose.msra.mxu0 0
        %1284 = vmatprep.subr.bf16.mxu0 0
        %1285 = vmatpush1.bf16.xpose.msra.mxu0 0
        %1286 = vmatprep.subr.bf16.mxu0 0
        %1287 = vmatpush1.bf16.xpose.msra.mxu0 0
        %1288 = vmatprep.subr.bf16.mxu0 0
        %1289 = vmatpush1.bf16.xpose.msra.mxu0 0
        %1290 = vmatprep.subr.bf16.mxu0 0
        %1291 = vmatpush1.bf16.xpose.msra.mxu0 0
        %1292 = vmatprep.subr.bf16.mxu0 0
        %1293 = vmatpush1.bf16.xpose.msra.mxu0 0
        %1294 = vmatprep.subr.bf16.mxu0 0
        %1295 = vmatpush1.bf16.xpose.msra.mxu0 0
        %1296 = vmatprep.subr.bf16.mxu0 0
        %1297 = vmatpush1.bf16.xpose.msra.mxu0 0
        %1298 = vmatprep.mubr.bf16.mxu0 0
        %1299 = vmatmul.mubr.bf16.gmra.mrb[0].mxu0 %v1257
        %v1300 = vpop.f32.mrb[0].mxu0
        %v1301 = vadd.f32 0.0, %v1300
        %v1302 = vpop.f32.mrb[0].mxu0
        %v1303 = vpop.f32.mrb[0].mxu0
        %v1304 = vpop.f32.mrb[0].mxu0
        %1305 = vdwg.mxu0
        %s1306 = sld [smem:[#allocation2]]
        %v1307 = vstv %s1306
        %v1308 = vadd.f32 %v1301, %v1307
        %v1309 = vsub.f32 0.0, %v1308
        %v1310 = vmul.f32 %v1309, 1.442695
        %v1311 = vpow.pop %v1310
        %v1312 = vadd.f32 %v1311, 1.0
        %v1313 = vrcp.pop %v1312
        %1314 = vst [vmem:[%s220] sm:$0x1] %v1313
        %s1315 = sand.u32 %s138, 1
        %s1316 = scalar_lea.sflag [#allocation4], %s1315
        %s1317 = sand.u32 %s138, 1
        %s1318 = scalar_lea.vmem [#allocation3], %s1317
        // Predicated region
        $region41: #{tpu_custom_call.1} parent=39 // pred_check
          %p1319 = pneg %p148
        $region42: #{tpu_custom_call.1} parent=39 // pred_check_branch
          %1321 = sbr.rel (%p1319) target = $region44
        $region43: #{tpu_custom_call.1} parent=39 // pred_region
          %s1323 = ssub.s32 16, 16
          %1324 = vsyncadd %s1316, %s1323
          %s1325 = smul.addr %s20, 16
          %s1326 = scalar_lea.hbm %s5, %s1325
          %s1328 = sshll.u32 %s1318, 4
          %s1329 = int_to_ptr.vmem [resolvable:$true] %s1328
          %1331 = dma.vmem_to_hbm [thread:$0]  %s1329, 16, %s1326, %s1316
        $region44: #{tpu_custom_call.1} parent=39 // pred_fallthru
          _
      $region40: #{tpu_custom_call.1} parent=5 // pred_fallthru
        _
      %p1332 = scmp.le.s32.totalorder 2, %s15
      // Predicated region
      $region45: #{tpu_custom_call.1} parent=5 // pred_check
        %p1333 = pneg %p1332
      $region46: #{tpu_custom_call.1} parent=5 // pred_check_branch
        %1335 = sbr.rel (%p1333) target = $region48
      $region47: #{tpu_custom_call.1} parent=5 // pred_region
        %s1336 = ssub.s32 %s15, 2
        // Predicated region
        $region49: #{tpu_custom_call.1} parent=47 // pred_check
          %p1337 = pneg %p154
        $region50: #{tpu_custom_call.1} parent=47 // pred_check_branch
          %1339 = sbr.rel (%p1337) target = $region52
        $region51: #{tpu_custom_call.1} parent=47 // pred_region
          %s1340 = sand.u32 %s139, 1
          %s1341 = scalar_lea.sflag [#allocation4], %s1340
          %s1342 = sand.u32 %s139, 1
          %s1343 = scalar_lea.vmem [#allocation3], %s1342
          %1344 = dma.done %s1341, 16
        $region52: #{tpu_custom_call.1} parent=47 // pred_fallthru
          _
      $region48: #{tpu_custom_call.1} parent=5 // pred_fallthru
        _
    $region6: #{tpu_custom_call.1} parent=1 // loop_footer
      %s19 = sadd.s32 1, %s15
    $region7: #{tpu_custom_call.1} parent=1 // loop_footer_branch
      %14 = sbr.rel target = $region3
    $region8: #{tpu_custom_call.1} parent=1 // loop_exit
      _
    %1345 = vsyncpa [#allocation4], 1
    %s1346 = scalar_lea.sflag [#allocation4], 1
    %1347 = vsyncpa %s1346, 1

</llo_original>
